<compile_context>
chip_gen: v7x
topology: tpu7x:2x2x1
jax: 0.10.0
libtpu: 0.0.40
codegen_flags: <defaults>
</compile_context>

<pallas_src>
import jax
import jax.numpy as jnp
from jax.experimental import pallas as pl
from jax.experimental.pallas import tpu as pltpu


HIDDEN = 128  # fixed second-layer width in the PyTorch module


def _swish(v):
    return v * jax.nn.sigmoid(v)


def _round_up(n, m):
    return ((n + m - 1) // m) * m


# ----------------------------------------------------------------------------
# Kernels
# ----------------------------------------------------------------------------
def ebmz_prod_std_kernel(x_ref, z_ref,
                         wx0_ref, bx0_ref, wx1_ref, bx1_ref,
                         wz0_ref, bz0_ref, wz1_ref, bz1_ref,
                         o_ref):
    """Standard two-layer path. Weights bf16, accumulation & VPU math f32."""
    bf16 = jnp.bfloat16
    f32 = jnp.float32

    hx = _swish(jnp.dot(x_ref[...].astype(bf16), wx0_ref[...],
                        preferred_element_type=f32) + bx0_ref[...])
    x1 = jnp.dot(hx.astype(bf16), wx1_ref[...],
                 preferred_element_type=f32) + bx1_ref[...]        # (TB, 128)

    hz = _swish(jnp.dot(z_ref[...].astype(bf16), wz0_ref[...],
                        preferred_element_type=f32) + bz0_ref[...])
    z1 = jnp.dot(hz.astype(bf16), wz1_ref[...],
                 preferred_element_type=f32) + bz1_ref[...]        # (TB, 128)

    # energy = sigmoid(mean(-x1*z1, -1)) = sigmoid(-(x1.z1)/128)
    e = jnp.sum(x1 * z1, axis=-1, keepdims=True) * (-1.0 / HIDDEN)  # (TB, 1)
    o_ref[...] = jax.nn.sigmoid(e)


def ebmz_prod_fold_kernel(x_ref, z_ref,
                          wx0_ref, bx0_ref, wz0_ref, bz0_ref,
                          m_ref, vx_ref, vz_ref, c_ref,
                          o_ref):
    """Small-F path: layer 2 folded into a bilinear form (exact algebra)."""
    bf16 = jnp.bfloat16
    f32 = jnp.float32

    hx = _swish(jnp.dot(x_ref[...].astype(bf16), wx0_ref[...],
                        preferred_element_type=f32) + bx0_ref[...])
    hz = _swish(jnp.dot(z_ref[...].astype(bf16), wz0_ref[...],
                        preferred_element_type=f32) + bz0_ref[...])

    g = jnp.dot(hx.astype(bf16), m_ref[...],
                preferred_element_type=f32)                        # (TB, F)

    # rowwise x1.z1 = sum(g*hz) + hx.vx + hz.vz + c
    x1z1 = jnp.sum(g * hz + hx * vx_ref[...] + hz * vz_ref[...],
                   axis=-1, keepdims=True) + c_ref[...]            # (TB, 1)
    o_ref[...] = jax.nn.sigmoid(x1z1 * (-1.0 / HIDDEN))


# ----------------------------------------------------------------------------
# Parameter prep (f32 master params -> kernel operands)
# ----------------------------------------------------------------------------
def _prepare_std_operands(p):
    bf16 = jnp.bfloat16
    return (p["wx0"].astype(bf16), p["bx0"],
            p["wx1"].astype(bf16), p["bx1"],
            p["wz0"].astype(bf16), p["bz0"],
            p["wz1"].astype(bf16), p["bz1"])


def _prepare_fold_operands(p):
    bf16 = jnp.bfloat16
    wx1, wz1 = p["wx1"], p["wz1"]            # (F, 128) f32
    bx1, bz1 = p["bx1"], p["bz1"]            # (1, 128) f32
    m = (wx1 @ wz1.T).astype(bf16)           # (F, F)
    vx = (wx1 @ bz1.T).T                     # (1, F) f32
    vz = (wz1 @ bx1.T).T                     # (1, F) f32
    c = jnp.sum(bx1 * bz1).reshape(1, 1)     # (1, 1) f32
    return (p["wx0"].astype(bf16), p["bx0"],
            p["wz0"].astype(bf16), p["bz0"],
            m, vx, vz, c)


# ----------------------------------------------------------------------------
# Wrapper
# ----------------------------------------------------------------------------
def ebmz_prod_forward(x, z, params, *, block_b=256, fold_layer2=None):
    """x, z: (B, F) f32. params: f32 master weights from init_params."""
    B, F = x.shape
    if fold_layer2 is None:
        fold_layer2 = F < 256   # fold strictly reduces layer-2 MXU work if F<256

    # Batch tile (multiple of 8 sublanes); pad batch so every tile is full.
    tb = min(block_b, _round_up(B, 8))
    Bp = _round_up(B, tb)
    if Bp != B:
        x = jnp.pad(x, ((0, Bp - B), (0, 0)))
        z = jnp.pad(z, ((0, Bp - B), (0, 0)))

    if fold_layer2:
        kernel = ebmz_prod_fold_kernel
        weight_ops = _prepare_fold_operands(params)
        flops = 6 * Bp * F * F + 8 * Bp * F
    else:
        kernel = ebmz_prod_std_kernel
        weight_ops = _prepare_std_operands(params)
        flops = 4 * Bp * F * (F + HIDDEN) + 4 * Bp * HIDDEN

    weight_bytes = sum(int(w.size) * w.dtype.itemsize for w in weight_ops)
    tile_bytes = 2 * tb * F * 4 + tb * 4                 # x + z + out per step
    vmem_limit = min(128 << 20, weight_bytes + 4 * tile_bytes + (8 << 20))

    xz_spec = pl.BlockSpec((tb, F), lambda i: (i, 0))
    # Weights/biases: full-array blocks, constant index map -> DMA'd once,
    # resident across all batch tiles.
    w_specs = [pl.BlockSpec(w.shape, lambda i: (0, 0)) for w in weight_ops]

    out = pl.pallas_call(
        kernel,
        out_shape=jax.ShapeDtypeStruct((Bp, 1), jnp.float32),
        grid_spec=pltpu.PrefetchScalarGridSpec(
            num_scalar_prefetch=0,
            grid=(Bp // tb,),
            in_specs=[xz_spec, xz_spec] + w_specs,
            out_specs=pl.BlockSpec((tb, 1), lambda i: (i, 0)),
        ),
        compiler_params=pltpu.CompilerParams(
            dimension_semantics=("parallel",),
            vmem_limit_bytes=int(vmem_limit),
        ),
        cost_estimate=pl.CostEstimate(
            flops=int(flops),
            transcendentals=int(2 * Bp * F + Bp),
            bytes_accessed=int(weight_bytes + 2 * Bp * F * 4 + Bp * 4),
        ),
    )(x, z, *weight_ops)

    return out[:B, 0]                                    # (B,) like torch's .mean(-1)


# ----------------------------------------------------------------------------
# Init + pure-JAX reference
# ----------------------------------------------------------------------------
def init_params(key, feature_dim):
    """PyTorch-Linear-style init (uniform +/- 1/sqrt(fan_in)), f32 master copy.

    Weights are stored pre-transposed: shape (F_in, F_out)."""
    ks = jax.random.split(key, 8)

    def lin(kw, kb, f_in, f_out):
        bound = 1.0 / jnp.sqrt(jnp.float32(f_in))
        w = jax.random.uniform(kw, (f_in, f_out), jnp.float32, -bound, bound)
        b = jax.random.uniform(kb, (1, f_out), jnp.float32, -bound, bound)
        return w, b

    wx0, bx0 = lin(ks[0], ks[1], feature_dim, feature_dim)
    wx1, bx1 = lin(ks[2], ks[3], feature_dim, HIDDEN)
    wz0, bz0 = lin(ks[4], ks[5], feature_dim, feature_dim)
    wz1, bz1 = lin(ks[6], ks[7], feature_dim, HIDDEN)
    return dict(wx0=wx0, bx0=bx0, wx1=wx1, bx1=bx1,
                wz0=wz0, bz0=bz0, wz1=wz1, bz1=bz1)


def _reference(x, z, p):
    """Pure-JAX f32 reference of the PyTorch forward (eval mode)."""
    hx = _swish(x @ p["wx0"] + p["bx0"])
    x1 = hx @ p["wx1"] + p["bx1"]
    hz = _swish(z @ p["wz0"] + p["bz0"])
    z1 = hz @ p["wz1"] + p["bz1"]
    return jax.nn.sigmoid(jnp.mean(-x1 * z1, axis=-1))


if __name__ == "__main__":
    B, F = 8, 32
    key = jax.random.PRNGKey(0)
    kx, kz, kp = jax.random.split(key, 3)

    x = jax.random.normal(kx, (B, F), jnp.float32)
    z = jax.random.normal(kz, (B, F), jnp.float32)
    params = init_params(kp, F)

    ref = _reference(x, z, params)

    # Exercise both code paths (folded small-F path and standard path).
    e_fold = jax.block_until_ready(ebmz_prod_forward(x, z, params, fold_layer2=True))
    e_std = jax.block_until_ready(ebmz_prod_forward(x, z, params, fold_layer2=False))

    assert e_fold.shape == (B,) and e_std.shape == (B,)
    # bf16 weight storage (f32 accumulation) -> tolerance loosened vs f32 ref.
    assert jnp.allclose(e_fold, ref, atol=1e-2, rtol=1e-2), (e_fold, ref)
    assert jnp.allclose(e_std, ref, atol=1e-2, rtol=1e-2), (e_std, ref)
    print("KERNEL_OK")
</pallas_src>

<mosaic_0001>
module attributes {stable_mosaic.version = 11 : i64} {
  func.func @ebmz_prod_fold_kernel(%arg0: i32, %arg1: memref<8x32xf32, #tpu.memory_space<vmem>>, %arg2: memref<8x32xf32, #tpu.memory_space<vmem>>, %arg3: memref<32x32xbf16, #tpu.memory_space<vmem>>, %arg4: memref<1x32xf32, #tpu.memory_space<vmem>>, %arg5: memref<32x32xbf16, #tpu.memory_space<vmem>>, %arg6: memref<1x32xf32, #tpu.memory_space<vmem>>, %arg7: memref<32x32xbf16, #tpu.memory_space<vmem>>, %arg8: memref<1x32xf32, #tpu.memory_space<vmem>>, %arg9: memref<1x32xf32, #tpu.memory_space<vmem>>, %arg10: memref<1x1xf32, #tpu.memory_space<vmem>>, %arg11: memref<8x1xf32, #tpu.memory_space<vmem>>) attributes {dimension_semantics = [#tpu.dimension_semantics<parallel>], iteration_bounds = array<i64: 1>, scalar_prefetch = 0 : i64, scratch_operands = 0 : i64, tpu.core_type = #tpu.core_type<tc>, window_params = [{transform_indices = @transform_0, window_bounds = array<i64: 8, 32>}, {transform_indices = @transform_1, window_bounds = array<i64: 8, 32>}, {pipeline_mode = #tpu.pipeline_mode<synchronous>, transform_indices = @transform_2, window_bounds = array<i64: 32, 32>}, {pipeline_mode = #tpu.pipeline_mode<synchronous>, transform_indices = @transform_3, window_bounds = array<i64: 1, 32>}, {pipeline_mode = #tpu.pipeline_mode<synchronous>, transform_indices = @transform_4, window_bounds = array<i64: 32, 32>}, {pipeline_mode = #tpu.pipeline_mode<synchronous>, transform_indices = @transform_5, window_bounds = array<i64: 1, 32>}, {pipeline_mode = #tpu.pipeline_mode<synchronous>, transform_indices = @transform_6, window_bounds = array<i64: 32, 32>}, {pipeline_mode = #tpu.pipeline_mode<synchronous>, transform_indices = @transform_7, window_bounds = array<i64: 1, 32>}, {pipeline_mode = #tpu.pipeline_mode<synchronous>, transform_indices = @transform_8, window_bounds = array<i64: 1, 32>}, {pipeline_mode = #tpu.pipeline_mode<synchronous>, transform_indices = @transform_9, window_bounds = array<i64: 1, 1>}, {transform_indices = @transform_10, window_bounds = array<i64: 8, 1>}]} {
    %c0 = arith.constant 0 : index
    %c0_0 = arith.constant 0 : index
    %0 = vector.load %arg1[%c0, %c0_0] : memref<8x32xf32, #tpu.memory_space<vmem>>, vector<8x32xf32>
    %1 = arith.truncf %0 : vector<8x32xf32> to vector<8x32xbf16>
    %c0_1 = arith.constant 0 : index
    %c0_2 = arith.constant 0 : index
    %2 = vector.load %arg3[%c0_1, %c0_2] : memref<32x32xbf16, #tpu.memory_space<vmem>>, vector<32x32xbf16>
    %cst = arith.constant dense<0.000000e+00> : vector<8x32xf32>
    %3 = tpu.matmul %1, %2, %cst {dimension_numbers = #tpu.dot_dimension_numbers<[1], [0], [0], [1], [0, 0, 1, 1], [], []>} : vector<8x32xbf16>, vector<32x32xbf16>, vector<8x32xf32> -> vector<8x32xf32>
    %c0_3 = arith.constant 0 : index
    %c0_4 = arith.constant 0 : index
    %4 = vector.load %arg4[%c0_3, %c0_4] : memref<1x32xf32, #tpu.memory_space<vmem>>, vector<1x32xf32>
    %5 = vector.broadcast %4 : vector<1x32xf32> to vector<8x32xf32>
    %6 = arith.addf %3, %5 : vector<8x32xf32>
    %7 = arith.negf %6 : vector<8x32xf32>
    %8 = math.exp %7 : vector<8x32xf32>
    %cst_5 = arith.constant 1.000000e+00 : f32
    %9 = vector.broadcast %cst_5 : f32 to vector<8x32xf32>
    %10 = arith.addf %9, %8 : vector<8x32xf32>
    %11 = arith.divf %9, %10 : vector<8x32xf32>
    %12 = arith.mulf %6, %11 : vector<8x32xf32>
    %c0_6 = arith.constant 0 : index
    %c0_7 = arith.constant 0 : index
    %13 = vector.load %arg2[%c0_6, %c0_7] : memref<8x32xf32, #tpu.memory_space<vmem>>, vector<8x32xf32>
    %14 = arith.truncf %13 : vector<8x32xf32> to vector<8x32xbf16>
    %c0_8 = arith.constant 0 : index
    %c0_9 = arith.constant 0 : index
    %15 = vector.load %arg5[%c0_8, %c0_9] : memref<32x32xbf16, #tpu.memory_space<vmem>>, vector<32x32xbf16>
    %cst_10 = arith.constant dense<0.000000e+00> : vector<8x32xf32>
    %16 = tpu.matmul %14, %15, %cst_10 {dimension_numbers = #tpu.dot_dimension_numbers<[1], [0], [0], [1], [0, 0, 1, 1], [], []>} : vector<8x32xbf16>, vector<32x32xbf16>, vector<8x32xf32> -> vector<8x32xf32>
    %c0_11 = arith.constant 0 : index
    %c0_12 = arith.constant 0 : index
    %17 = vector.load %arg6[%c0_11, %c0_12] : memref<1x32xf32, #tpu.memory_space<vmem>>, vector<1x32xf32>
    %18 = vector.broadcast %17 : vector<1x32xf32> to vector<8x32xf32>
    %19 = arith.addf %16, %18 : vector<8x32xf32>
    %20 = arith.negf %19 : vector<8x32xf32>
    %21 = math.exp %20 : vector<8x32xf32>
    %cst_13 = arith.constant 1.000000e+00 : f32
    %22 = vector.broadcast %cst_13 : f32 to vector<8x32xf32>
    %23 = arith.addf %22, %21 : vector<8x32xf32>
    %24 = arith.divf %22, %23 : vector<8x32xf32>
    %25 = arith.mulf %19, %24 : vector<8x32xf32>
    %26 = arith.truncf %12 : vector<8x32xf32> to vector<8x32xbf16>
    %c0_14 = arith.constant 0 : index
    %c0_15 = arith.constant 0 : index
    %27 = vector.load %arg7[%c0_14, %c0_15] : memref<32x32xbf16, #tpu.memory_space<vmem>>, vector<32x32xbf16>
    %cst_16 = arith.constant dense<0.000000e+00> : vector<8x32xf32>
    %28 = tpu.matmul %26, %27, %cst_16 {dimension_numbers = #tpu.dot_dimension_numbers<[1], [0], [0], [1], [0, 0, 1, 1], [], []>} : vector<8x32xbf16>, vector<32x32xbf16>, vector<8x32xf32> -> vector<8x32xf32>
    %29 = arith.mulf %28, %25 : vector<8x32xf32>
    %c0_17 = arith.constant 0 : index
    %c0_18 = arith.constant 0 : index
    %30 = vector.load %arg8[%c0_17, %c0_18] : memref<1x32xf32, #tpu.memory_space<vmem>>, vector<1x32xf32>
    %31 = vector.broadcast %30 : vector<1x32xf32> to vector<8x32xf32>
    %32 = arith.mulf %12, %31 : vector<8x32xf32>
    %33 = arith.addf %29, %32 : vector<8x32xf32>
    %c0_19 = arith.constant 0 : index
    %c0_20 = arith.constant 0 : index
    %34 = vector.load %arg9[%c0_19, %c0_20] : memref<1x32xf32, #tpu.memory_space<vmem>>, vector<1x32xf32>
    %35 = vector.broadcast %34 : vector<1x32xf32> to vector<8x32xf32>
    %36 = arith.mulf %25, %35 : vector<8x32xf32>
    %37 = arith.addf %33, %36 : vector<8x32xf32>
    %cst_21 = arith.constant dense<0.000000e+00> : vector<8xf32>
    %38 = vector.multi_reduction <add>, %37, %cst_21 [1] : vector<8x32xf32> to vector<8xf32>
    %39 = vector.shape_cast %38 : vector<8xf32> to vector<8x1xf32>
    %c0_22 = arith.constant 0 : index
    %c0_23 = arith.constant 0 : index
    %40 = vector.load %arg10[%c0_22, %c0_23] : memref<1x1xf32, #tpu.memory_space<vmem>>, vector<1x1xf32>
    %41 = vector.broadcast %40 : vector<1x1xf32> to vector<8x1xf32>
    %42 = arith.addf %39, %41 : vector<8x1xf32>
    %cst_24 = arith.constant -7.812500e-03 : f32
    %43 = vector.broadcast %cst_24 : f32 to vector<8x1xf32>
    %44 = arith.mulf %42, %43 : vector<8x1xf32>
    %45 = arith.negf %44 : vector<8x1xf32>
    %46 = math.exp %45 : vector<8x1xf32>
    %cst_25 = arith.constant 1.000000e+00 : f32
    %47 = vector.broadcast %cst_25 : f32 to vector<8x1xf32>
    %48 = arith.addf %47, %46 : vector<8x1xf32>
    %49 = arith.divf %47, %48 : vector<8x1xf32>
    %c0_26 = arith.constant 0 : index
    %c0_27 = arith.constant 0 : index
    %50 = vector.load %arg11[%c0_26, %c0_27] : memref<8x1xf32, #tpu.memory_space<vmem>>, vector<8x1xf32>
    tpu.vector_store %arg11[%c0_26, %c0_27], %49 {strides = array<i32>} : memref<8x1xf32, #tpu.memory_space<vmem>>, vector<8x1xf32>,
    return
  }
  func.func @transform_0(%arg0: i32) -> (i32, i32) {
    %c0_i32 = arith.constant 0 : i32
    %c0_i32_0 = arith.constant 0 : i32
    return %arg0, %c0_i32 : i32, i32
  }
  func.func @transform_1(%arg0: i32) -> (i32, i32) {
    %c0_i32 = arith.constant 0 : i32
    %c0_i32_0 = arith.constant 0 : i32
    return %arg0, %c0_i32 : i32, i32
  }
  func.func @transform_2(%arg0: i32) -> (i32, i32) {
    %c0_i32 = arith.constant 0 : i32
    %c0_i32_0 = arith.constant 0 : i32
    %c0_i32_1 = arith.constant 0 : i32
    return %c0_i32, %c0_i32_0 : i32, i32
  }
  func.func @transform_3(%arg0: i32) -> (i32, i32) {
    %c0_i32 = arith.constant 0 : i32
    %c0_i32_0 = arith.constant 0 : i32
    %c0_i32_1 = arith.constant 0 : i32
    return %c0_i32, %c0_i32_0 : i32, i32
  }
  func.func @transform_4(%arg0: i32) -> (i32, i32) {
    %c0_i32 = arith.constant 0 : i32
    %c0_i32_0 = arith.constant 0 : i32
    %c0_i32_1 = arith.constant 0 : i32
    return %c0_i32, %c0_i32_0 : i32, i32
  }
  func.func @transform_5(%arg0: i32) -> (i32, i32) {
    %c0_i32 = arith.constant 0 : i32
    %c0_i32_0 = arith.constant 0 : i32
    %c0_i32_1 = arith.constant 0 : i32
    return %c0_i32, %c0_i32_0 : i32, i32
  }
  func.func @transform_6(%arg0: i32) -> (i32, i32) {
    %c0_i32 = arith.constant 0 : i32
    %c0_i32_0 = arith.constant 0 : i32
    %c0_i32_1 = arith.constant 0 : i32
    return %c0_i32, %c0_i32_0 : i32, i32
  }
  func.func @transform_7(%arg0: i32) -> (i32, i32) {
    %c0_i32 = arith.constant 0 : i32
    %c0_i32_0 = arith.constant 0 : i32
    %c0_i32_1 = arith.constant 0 : i32
    return %c0_i32, %c0_i32_0 : i32, i32
  }
  func.func @transform_8(%arg0: i32) -> (i32, i32) {
    %c0_i32 = arith.constant 0 : i32
    %c0_i32_0 = arith.constant 0 : i32
    %c0_i32_1 = arith.constant 0 : i32
    return %c0_i32, %c0_i32_0 : i32, i32
  }
  func.func @transform_9(%arg0: i32) -> (i32, i32) {
    %c0_i32 = arith.constant 0 : i32
    %c0_i32_0 = arith.constant 0 : i32
    %c0_i32_1 = arith.constant 0 : i32
    return %c0_i32, %c0_i32_0 : i32, i32
  }
  func.func @transform_10(%arg0: i32) -> (i32, i32) {
    %c0_i32 = arith.constant 0 : i32
    %c0_i32_0 = arith.constant 0 : i32
    return %arg0, %c0_i32 : i32, i32
  }
}

</mosaic_0001>

<llo_original>
// kernel: tpu_custom_call.1
$region0: #{tpu_custom_call.1}
  #allocation0 [shape = 'u32[]', space=smem, size = 0x4, offset = 0x4, fixed_abs, tag = 'smem constant byte address 0x4 - core index']
  #allocation1 [shape = 'u32[144,128]{1,0:T(1,128)}', space=vmem, size = 0x12000, scoped, tag = 'internal scratch']
  #allocation2 [shape = 'f32[1,1]{1,0:T(1,128)S(1)}', space=vmem, size = 0x200, scoped, tag = 'scoped memory for tpu_custom_call.1']
  %s0 = inlined_call_operand.hbm [shape: f32[8,32], index: 0, kind: input, shape index: {}]
  %s1 = inlined_call_operand.hbm [shape: f32[8,32], index: 1, kind: input, shape index: {}]
  %s2 = inlined_call_operand.hbm [shape: bf16[32,32], index: 2, kind: input, shape index: {}]
  %s3 = inlined_call_operand.vmem [shape: f32[1,32], index: 3, kind: input, shape index: {}]
  %s4 = inlined_call_operand.vmem [shape: bf16[32,32], index: 4, kind: input, shape index: {}]
  %s5 = inlined_call_operand.vmem [shape: f32[1,32], index: 5, kind: input, shape index: {}]
  %s6 = inlined_call_operand.hbm [shape: bf16[32,32], index: 6, kind: input, shape index: {}]
  %s7 = inlined_call_operand.vmem [shape: f32[1,32], index: 7, kind: input, shape index: {}]
  %s8 = inlined_call_operand.vmem [shape: f32[1,32], index: 8, kind: input, shape index: {}]
  %s9 = inlined_call_operand.<no memory space> [shape: f32[1,1], index: 9, kind: input, shape index: {}]
  %s10 = inlined_call_operand.vmem [shape: f32[8,1], index: 10, kind: output, shape index: {}]
  %s11 = sld [smem:[#allocation0]]
  $region66: #{tpu_custom_call.1} parent=0
    _
  %s13 = ssub.s32 1, %s11
  %s14 = scalar_select 0, %s13, %s11
  %v15 = vstv %s9
  %16 = vst [vmem:[#allocation2] sm:$0x1] %v15
  $region1: #{tpu_custom_call.1} parent=0
    #allocation3 [shape = 'u8[4096]{0}', space=vmem, size = 0x1000, scoped, tag = 'input window, operand 0, single buffered']
    #allocation4 [shape = 's32[1]{0}', space=sflag, size = 0x4, scoped, tag = 'scoped memory for tpu_custom_call.1']
    #allocation5 [shape = 'u8[4096]{0}', space=vmem, size = 0x1000, scoped, tag = 'input window, operand 1, single buffered']
    #allocation6 [shape = 's32[1]{0}', space=sflag, size = 0x4, scoped, tag = 'scoped memory for tpu_custom_call.1']
    #allocation7 [shape = 'u8[8192]{0}', space=vmem, size = 0x2000, scoped, tag = 'input window, operand 2, single buffered']
    #allocation8 [shape = 'u8[8192]{0}', space=vmem, size = 0x2000, scoped, tag = 'input window, operand 6, single buffered']
    #allocation9 [shape = 's32[1]{0}', space=sflag, size = 0x4, scoped, tag = 'scoped memory for tpu_custom_call.1']
    %17 = vsyncpa [#allocation4], 0
    %18 = vsyncpa [#allocation6], 0
    %19 = vsyncpa [#allocation9], 0
    // Predicated region
    $region2: #{tpu_custom_call.1} parent=1 // pred_check
      _
    $region3: #{tpu_custom_call.1} parent=1 // pred_check_branch
      %21 = sbr.rel (0) target = $region5
    $region4: #{tpu_custom_call.1} parent=1 // pred_region
      %s23 = ssub.s32 128, 128
      %24 = vsyncadd [#allocation4], %s23
      %s26 = sshll.u32 [#allocation3], 4
      %s27 = int_to_ptr.vmem [resolvable:$true] %s26
      %29 = dma.hbm_to_vmem [thread:$0]  %s0, 128, %s27, [#allocation4]
    $region5: #{tpu_custom_call.1} parent=1 // pred_fallthru
      _
    // Predicated region
    $region6: #{tpu_custom_call.1} parent=1 // pred_check
      _
    $region7: #{tpu_custom_call.1} parent=1 // pred_check_branch
      %31 = sbr.rel (0) target = $region9
    $region8: #{tpu_custom_call.1} parent=1 // pred_region
      %s33 = ssub.s32 128, 128
      %34 = vsyncadd [#allocation6], %s33
      %s36 = sshll.u32 [#allocation5], 4
      %s37 = int_to_ptr.vmem [resolvable:$true] %s36
      %39 = dma.hbm_to_vmem [thread:$0]  %s1, 128, %s37, [#allocation6]
    $region9: #{tpu_custom_call.1} parent=1 // pred_fallthru
      _
    // Predicated region
    $region10: #{tpu_custom_call.1} parent=1 // pred_check
      _
    $region11: #{tpu_custom_call.1} parent=1 // pred_check_branch
      %41 = sbr.rel (0) target = $region13
    $region12: #{tpu_custom_call.1} parent=1 // pred_region
      %s43 = ssub.s32 256, 256
      %44 = vsyncadd [#allocation6], %s43
      %s45 = sshll.u32 [#allocation7], 4
      %s46 = int_to_ptr.vmem [resolvable:$true] %s45
      %51 = dma.hbm_to_vmem [thread:$0]  %s2, 256, %s46, [#allocation6], 64, 64, 4
    $region13: #{tpu_custom_call.1} parent=1 // pred_fallthru
      _
    // Predicated region
    $region14: #{tpu_custom_call.1} parent=1 // pred_check
      _
    $region15: #{tpu_custom_call.1} parent=1 // pred_check_branch
      %53 = sbr.rel (0) target = $region17
    $region16: #{tpu_custom_call.1} parent=1 // pred_region
      _
    $region17: #{tpu_custom_call.1} parent=1 // pred_fallthru
      _
    // Predicated region
    $region18: #{tpu_custom_call.1} parent=1 // pred_check
      _
    $region19: #{tpu_custom_call.1} parent=1 // pred_check_branch
      %55 = sbr.rel (0) target = $region21
    $region20: #{tpu_custom_call.1} parent=1 // pred_region
      _
    $region21: #{tpu_custom_call.1} parent=1 // pred_fallthru
      _
    // Predicated region
    $region22: #{tpu_custom_call.1} parent=1 // pred_check
      _
    $region23: #{tpu_custom_call.1} parent=1 // pred_check_branch
      %57 = sbr.rel (0) target = $region25
    $region24: #{tpu_custom_call.1} parent=1 // pred_region
      _
    $region25: #{tpu_custom_call.1} parent=1 // pred_fallthru
      _
    // Predicated region
    $region26: #{tpu_custom_call.1} parent=1 // pred_check
      _
    $region27: #{tpu_custom_call.1} parent=1 // pred_check_branch
      %59 = sbr.rel (0) target = $region29
    $region28: #{tpu_custom_call.1} parent=1 // pred_region
      %s61 = ssub.s32 256, 256
      %62 = vsyncadd [#allocation9], %s61
      %s63 = sshll.u32 [#allocation8], 4
      %s64 = int_to_ptr.vmem [resolvable:$true] %s63
      %69 = dma.hbm_to_vmem [thread:$0]  %s6, 256, %s64, [#allocation9], 64, 64, 4
    $region29: #{tpu_custom_call.1} parent=1 // pred_fallthru
      _
    // Predicated region
    $region30: #{tpu_custom_call.1} parent=1 // pred_check
      _
    $region31: #{tpu_custom_call.1} parent=1 // pred_check_branch
      %71 = sbr.rel (0) target = $region33
    $region32: #{tpu_custom_call.1} parent=1 // pred_region
      _
    $region33: #{tpu_custom_call.1} parent=1 // pred_fallthru
      _
    // Predicated region
    $region34: #{tpu_custom_call.1} parent=1 // pred_check
      _
    $region35: #{tpu_custom_call.1} parent=1 // pred_check_branch
      %73 = sbr.rel (0) target = $region37
    $region36: #{tpu_custom_call.1} parent=1 // pred_region
      _
    $region37: #{tpu_custom_call.1} parent=1 // pred_fallthru
      _
    // Predicated region
    $region38: #{tpu_custom_call.1} parent=1 // pred_check
      _
    $region39: #{tpu_custom_call.1} parent=1 // pred_check_branch
      %75 = sbr.rel (0) target = $region41
    $region40: #{tpu_custom_call.1} parent=1 // pred_region
      _
    $region41: #{tpu_custom_call.1} parent=1 // pred_fallthru
      _
    // Predicated region
    $region42: #{tpu_custom_call.1} parent=1 // pred_check
      _
    $region43: #{tpu_custom_call.1} parent=1 // pred_check_branch
      %77 = sbr.rel (0) target = $region45
    $region44: #{tpu_custom_call.1} parent=1 // pred_region
      %78 = dma.done [#allocation4], 128
    $region45: #{tpu_custom_call.1} parent=1 // pred_fallthru
      _
    // Predicated region
    $region46: #{tpu_custom_call.1} parent=1 // pred_check
      _
    $region47: #{tpu_custom_call.1} parent=1 // pred_check_branch
      %80 = sbr.rel (0) target = $region49
    $region48: #{tpu_custom_call.1} parent=1 // pred_region
      %81 = dma.done [#allocation6], 128
    $region49: #{tpu_custom_call.1} parent=1 // pred_fallthru
      _
    // Predicated region
    $region50: #{tpu_custom_call.1} parent=1 // pred_check
      _
    $region51: #{tpu_custom_call.1} parent=1 // pred_check_branch
      %83 = sbr.rel (0) target = $region53
    $region52: #{tpu_custom_call.1} parent=1 // pred_region
      %84 = dma.done [#allocation6], 256
    $region53: #{tpu_custom_call.1} parent=1 // pred_fallthru
      _
    // Predicated region
    $region54: #{tpu_custom_call.1} parent=1 // pred_check
      _
    $region55: #{tpu_custom_call.1} parent=1 // pred_check_branch
      %86 = sbr.rel (0) target = $region57
    $region56: #{tpu_custom_call.1} parent=1 // pred_region
      %87 = dma.done [#allocation9], 256
    $region57: #{tpu_custom_call.1} parent=1 // pred_fallthru
      _
    %v89 = vld [vmem:[#allocation3] sm:$0xff]
    %v90 = vpack.c.bf16 %v89, %v89
    %v91 = vld [vmem:[#allocation7] sm:$0xf]
    %v92 = vld [vmem:[#allocation7 + $0x4] sm:$0xf]
    %v93 = vld [vmem:[#allocation7 + $0x8] sm:$0xf]
    %v94 = vld [vmem:[#allocation7 + $0xc] sm:$0xf]
    %v95 = vld [vmem:[%s3] sm:$0x1]
    %v97 = vlaneseq
    %v98 = vshrl.u32 %v97, 7
    %v99 = vsub.s32 0, %v98
    %v100 = vrot.slane %v95, %v99
    %v106 = vunpack.c.l.b16 %v91
    %v107 = vunpack.c.l.b16 %v92
    %v108 = vunpack.c.l.b16 %v93
    %v109 = vunpack.c.l.b16 %v94
    %v110 = vpack.c.b16 %v107, %v106
    %v111 = vpack.c.b16 %v109, %v108
    %vm114 = vcmask 261120
    %v116 = vsel %vm114, %v90, 0
    %118 = vmatprep.subr.bf16.mxu0 0
    %119 = vmatpush1.bf16.msra.mxu0 %v110
    %120 = vmatprep.subr.bf16.mxu0 0
    %121 = vmatpush1.bf16.msra.mxu0 %v111
    %122 = vmatprep.subr.bf16.mxu0 0
    %123 = vmatpush1.bf16.msra.mxu0 0
    %124 = vmatprep.subr.bf16.mxu0 0
    %125 = vmatpush1.bf16.msra.mxu0 0
    %126 = vmatprep.subr.bf16.mxu0 0
    %127 = vmatpush1.bf16.msra.mxu0 0
    %128 = vmatprep.subr.bf16.mxu0 0
    %129 = vmatpush1.bf16.msra.mxu0 0
    %130 = vmatprep.subr.bf16.mxu0 0
    %131 = vmatpush1.bf16.msra.mxu0 0
    %132 = vmatprep.subr.bf16.mxu0 0
    %133 = vmatpush1.bf16.msra.mxu0 0
    %134 = vmatprep.subr.bf16.mxu0 0
    %135 = vmatpush1.bf16.msra.mxu0 0
    %136 = vmatprep.subr.bf16.mxu0 0
    %137 = vmatpush1.bf16.msra.mxu0 0
    %138 = vmatprep.subr.bf16.mxu0 0
    %139 = vmatpush1.bf16.msra.mxu0 0
    %140 = vmatprep.subr.bf16.mxu0 0
    %141 = vmatpush1.bf16.msra.mxu0 0
    %142 = vmatprep.subr.bf16.mxu0 0
    %143 = vmatpush1.bf16.msra.mxu0 0
    %144 = vmatprep.subr.bf16.mxu0 0
    %145 = vmatpush1.bf16.msra.mxu0 0
    %146 = vmatprep.subr.bf16.mxu0 0
    %147 = vmatpush1.bf16.msra.mxu0 0
    %148 = vmatprep.subr.bf16.mxu0 0
    %149 = vmatpush1.bf16.msra.mxu0 0
    %150 = vmatprep.mubr.bf16.mxu0 0
    %151 = vmatmul.mubr.bf16.gmra.mrb[0].mxu0 %v116
    %v152 = vpop.f32.mrb[0].mxu0
    %v153 = vadd.f32 %v100, %v152
    %v154 = vpop.f32.mrb[0].mxu0
    %v155 = vpop.f32.mrb[0].mxu0
    %v156 = vpop.f32.mrb[0].mxu0
    %157 = vdwg.mxu0
    %v158 = vxor.u32 %v153, 2147483648
    %v159 = vmul.f32 %v158, 1.442695
    %v160 = vpow.pop %v159
    %v161 = vadd.f32 %v160, 1.0
    %v162 = vrcp.pop %v161
    %v163 = vmul.f32 1.0, %v162
    %v164 = vmul.f32 %v153, %v163
    %v165 = vld [vmem:[#allocation5] sm:$0xff]
    %v166 = vpack.c.bf16 %v165, %v165
    %v167 = vld [vmem:[%s4] sm:$0xf]
    %v168 = vld [vmem:[%s4 + $0x4] sm:$0xf]
    %v169 = vld [vmem:[%s4 + $0x8] sm:$0xf]
    %v170 = vld [vmem:[%s4 + $0xc] sm:$0xf]
    %v171 = vld [vmem:[%s5] sm:$0x1]
    %v173 = vlaneseq
    %v174 = vshrl.u32 %v173, 7
    %v175 = vsub.s32 0, %v174
    %v176 = vrot.slane %v171, %v175
    %v182 = vunpack.c.l.b16 %v167
    %v183 = vunpack.c.l.b16 %v168
    %v184 = vunpack.c.l.b16 %v169
    %v185 = vunpack.c.l.b16 %v170
    %v186 = vpack.c.b16 %v183, %v182
    %v187 = vpack.c.b16 %v185, %v184
    %v191 = vsel %vm114, %v166, 0
    %193 = vmatprep.subr.bf16.mxu0 0
    %194 = vmatpush1.bf16.msra.mxu0 %v186
    %195 = vmatprep.subr.bf16.mxu0 0
    %196 = vmatpush1.bf16.msra.mxu0 %v187
    %197 = vmatprep.subr.bf16.mxu0 0
    %198 = vmatpush1.bf16.msra.mxu0 0
    %199 = vmatprep.subr.bf16.mxu0 0
    %200 = vmatpush1.bf16.msra.mxu0 0
    %201 = vmatprep.subr.bf16.mxu0 0
    %202 = vmatpush1.bf16.msra.mxu0 0
    %203 = vmatprep.subr.bf16.mxu0 0
    %204 = vmatpush1.bf16.msra.mxu0 0
    %205 = vmatprep.subr.bf16.mxu0 0
    %206 = vmatpush1.bf16.msra.mxu0 0
    %207 = vmatprep.subr.bf16.mxu0 0
    %208 = vmatpush1.bf16.msra.mxu0 0
    %209 = vmatprep.subr.bf16.mxu0 0
    %210 = vmatpush1.bf16.msra.mxu0 0
    %211 = vmatprep.subr.bf16.mxu0 0
    %212 = vmatpush1.bf16.msra.mxu0 0
    %213 = vmatprep.subr.bf16.mxu0 0
    %214 = vmatpush1.bf16.msra.mxu0 0
    %215 = vmatprep.subr.bf16.mxu0 0
    %216 = vmatpush1.bf16.msra.mxu0 0
    %217 = vmatprep.subr.bf16.mxu0 0
    %218 = vmatpush1.bf16.msra.mxu0 0
    %219 = vmatprep.subr.bf16.mxu0 0
    %220 = vmatpush1.bf16.msra.mxu0 0
    %221 = vmatprep.subr.bf16.mxu0 0
    %222 = vmatpush1.bf16.msra.mxu0 0
    %223 = vmatprep.subr.bf16.mxu0 0
    %224 = vmatpush1.bf16.msra.mxu0 0
    %225 = vmatprep.mubr.bf16.mxu0 0
    %226 = vmatmul.mubr.bf16.gmra.mrb[0].mxu0 %v191
    %v227 = vpop.f32.mrb[0].mxu0
    %v228 = vadd.f32 %v176, %v227
    %v229 = vpop.f32.mrb[0].mxu0
    %v230 = vpop.f32.mrb[0].mxu0
    %v231 = vpop.f32.mrb[0].mxu0
    %232 = vdwg.mxu0
    %v233 = vxor.u32 %v228, 2147483648
    %v234 = vmul.f32 %v233, 1.442695
    %v235 = vpow.pop %v234
    %v236 = vadd.f32 %v235, 1.0
    %v237 = vrcp.pop %v236
    %v238 = vmul.f32 1.0, %v237
    %v239 = vmul.f32 %v228, %v238
    %v240 = vpack.c.bf16 %v164, %v164
    %v241 = vld [vmem:[#allocation8] sm:$0xf]
    %v242 = vld [vmem:[#allocation8 + $0x4] sm:$0xf]
    %v243 = vld [vmem:[#allocation8 + $0x8] sm:$0xf]
    %v244 = vld [vmem:[#allocation8 + $0xc] sm:$0xf]
    %v249 = vunpack.c.l.b16 %v241
    %v250 = vunpack.c.l.b16 %v242
    %v251 = vunpack.c.l.b16 %v243
    %v252 = vunpack.c.l.b16 %v244
    %v253 = vpack.c.b16 %v250, %v249
    %v254 = vpack.c.b16 %v252, %v251
    %v258 = vsel %vm114, %v240, 0
    %260 = vmatprep.subr.bf16.mxu0 0
    %261 = vmatpush1.bf16.msra.mxu0 %v253
    %262 = vmatprep.subr.bf16.mxu0 0
    %263 = vmatpush1.bf16.msra.mxu0 %v254
    %264 = vmatprep.subr.bf16.mxu0 0
    %265 = vmatpush1.bf16.msra.mxu0 0
    %266 = vmatprep.subr.bf16.mxu0 0
    %267 = vmatpush1.bf16.msra.mxu0 0
    %268 = vmatprep.subr.bf16.mxu0 0
    %269 = vmatpush1.bf16.msra.mxu0 0
    %270 = vmatprep.subr.bf16.mxu0 0
    %271 = vmatpush1.bf16.msra.mxu0 0
    %272 = vmatprep.subr.bf16.mxu0 0
    %273 = vmatpush1.bf16.msra.mxu0 0
    %274 = vmatprep.subr.bf16.mxu0 0
    %275 = vmatpush1.bf16.msra.mxu0 0
    %276 = vmatprep.subr.bf16.mxu0 0
    %277 = vmatpush1.bf16.msra.mxu0 0
    %278 = vmatprep.subr.bf16.mxu0 0
    %279 = vmatpush1.bf16.msra.mxu0 0
    %280 = vmatprep.subr.bf16.mxu0 0
    %281 = vmatpush1.bf16.msra.mxu0 0
    %282 = vmatprep.subr.bf16.mxu0 0
    %283 = vmatpush1.bf16.msra.mxu0 0
    %284 = vmatprep.subr.bf16.mxu0 0
    %285 = vmatpush1.bf16.msra.mxu0 0
    %286 = vmatprep.subr.bf16.mxu0 0
    %287 = vmatpush1.bf16.msra.mxu0 0
    %288 = vmatprep.subr.bf16.mxu0 0
    %289 = vmatpush1.bf16.msra.mxu0 0
    %290 = vmatprep.subr.bf16.mxu0 0
    %291 = vmatpush1.bf16.msra.mxu0 0
    %292 = vmatprep.mubr.bf16.mxu0 0
    %293 = vmatmul.mubr.bf16.gmra.mrb[0].mxu0 %v258
    %v294 = vpop.f32.mrb[0].mxu0
    %v295 = vadd.f32 0.0, %v294
    %v296 = vpop.f32.mrb[0].mxu0
    %v297 = vpop.f32.mrb[0].mxu0
    %v298 = vpop.f32.mrb[0].mxu0
    %299 = vdwg.mxu0
    %v300 = vmul.f32 %v295, %v239
    %v301 = vld [vmem:[%s7] sm:$0x1]
    %v303 = vlaneseq
    %v304 = vshrl.u32 %v303, 7
    %v305 = vsub.s32 0, %v304
    %v306 = vrot.slane %v301, %v305
    %v308 = vmul.f32 %v164, %v306
    %v309 = vadd.f32 %v300, %v308
    %v310 = vld [vmem:[%s8] sm:$0x1]
    %v312 = vlaneseq
    %v313 = vshrl.u32 %v312, 7
    %v314 = vsub.s32 0, %v313
    %v315 = vrot.slane %v310, %v314
    %v317 = vmul.f32 %v239, %v315
    %v318 = vadd.f32 %v309, %v317
    %v319 = vsel %vm114, %v318, 0.0
    %320 = vadd.xlane.f32.xlu0 %v319
    %v321 = vpop.xlane.xlu0 %320
    %v322 = vld [vmem:[#allocation2] sm:$0x1]
    %v324 = vlaneseq
    %v325 = vshrl.u32 %v324, 7
    %v326 = vsub.s32 0, %v325
    %v327 = vrot.slane %v322, %v326
    %v329 = vadd.f32 %v321, %v327
    %v330 = vmul.f32 %v329, -0.0078125
    %v331 = vxor.u32 %v330, 2147483648
    %v332 = vmul.f32 %v331, 1.442695
    %v333 = vpow.pop %v332
    %v334 = vadd.f32 %v333, 1.0
    %v335 = vrcp.pop %v334
    %v336 = vmul.f32 1.0, %v335
    %vm337 = vcmask 7168
    %338 = vst.msk [vmem:[%s10] sm:$0xff] %vm337, %v336
    // Predicated region
    $region58: #{tpu_custom_call.1} parent=1 // pred_check
      _
    $region59: #{tpu_custom_call.1} parent=1 // pred_check_branch
      %340 = sbr.rel (0) target = $region61
    $region60: #{tpu_custom_call.1} parent=1 // pred_region
      _
    $region61: #{tpu_custom_call.1} parent=1 // pred_fallthru
      _
    // Predicated region
    $region62: #{tpu_custom_call.1} parent=1 // pred_check
      _
    $region63: #{tpu_custom_call.1} parent=1 // pred_check_branch
      %342 = sbr.rel (0) target = $region65
    $region64: #{tpu_custom_call.1} parent=1 // pred_region
      _
    $region65: #{tpu_custom_call.1} parent=1 // pred_fallthru
      _
    %343 = vsyncpa [#allocation4], 1
    %344 = vsyncpa [#allocation6], 1
    %345 = vsyncpa [#allocation9], 1

</llo_original>
